<compile_context>
chip_gen: v5e
topology: v5e:2x2
jax: 0.10.0
libtpu: 0.0.40
codegen_flags: <defaults>
</compile_context>

<pallas_src>
import functools

import jax
import jax.numpy as jnp
from jax import lax
from jax.experimental import pallas as pl
from jax.experimental.pallas import tpu as pltpu

WINS = 7            # FSMN memory window (self.wins = 7 in the torch module)
HALF = WINS // 2    # 3 frames of context per side per DFSMN block
_SCRATCH_PAD = 8    # sublane-aligned zero pad on each side of the DFSMN scratch


def _round_up(x, m):
    return (x + m - 1) // m * m


def _device_vmem_capacity():
    try:
        return int(pltpu.get_tpu_info().vmem_capacity_bytes)
    except Exception:
        return 64 * 2**20          # conservative (v7x per-core VMEM)


# ----------------------------------------------------------------------------
# Pallas kernel: FSMNEncoder forward for one (batch, T-tile) grid point.
# ----------------------------------------------------------------------------
def fsmn_kernel(x_ref,                    # (1, 1, w_tile, k_dim) bf16 window
                w0_ref, b0_ref,           # (k_dim, H) bf16, (1, H) f32 (BN0 folded)
                mem_ref,                  # (num_blocks, WINS, H) f32
                w1_ref, b1_ref,           # (H, H) bf16, (1, H) f32 (BN1 folded)
                w2_ref, b2_ref,           # (H, H) bf16, (1, H) f32 (BN2 folded)
                w3_ref, b3_ref,           # (H, Cout) bf16, (1, Cout) f32
                out_ref,                  # (1, t_tile, Cout) f32
                hbuf_ref,                 # (w_tile + 2*PAD, H) f32 scratch
                *, t_tile, halo, seq_len, num_blocks):
    pad = _SCRATCH_PAD
    t = pl.program_id(1)
    w_tile = t_tile + 2 * halo
    h_dim = b0_ref.shape[-1]

    # conv0 (kernel (1,3), no padding) == per-frame dense matmul on the MXU,
    # with BatchNorm0 already folded into (w0, b0).
    x = x_ref[0, 0]                                               # (W, K) bf16
    h = jnp.dot(x, w0_ref[...],
                preferred_element_type=jnp.float32) + b0_ref[...]  # (W, H) f32

    # Valid-frame mask: window-local frame w maps to original frame
    # t*t_tile - halo + w; frames outside [0, seq_len) are zero padding and
    # must read as zero inside every DFSMN block ("same" conv padding).
    w_idx = lax.broadcasted_iota(jnp.int32, (w_tile, 1), 0)
    orig = w_idx + (t * t_tile - halo)
    valid = jnp.logical_and(orig >= 0, orig < seq_len).astype(jnp.float32)
    h = h * valid

    # Halo'd DFSMN scratch: zero the 8-row pads once per tile (they are never
    # written again), then keep the DFSMN state resident in rows
    # [pad, pad + w_tile).  Taps become small shifted-slice reads (offset
    # pad + k - HALF in [5, 11]) instead of full-window rolls.
    zeros_pad = jnp.zeros((pad, h_dim), jnp.float32)
    hbuf_ref[pl.ds(0, pad), :] = zeros_pad
    hbuf_ref[pl.ds(pad + w_tile, pad), :] = zeros_pad
    hbuf_ref[pl.ds(pad, w_tile), :] = h

    # DFSMN blocks: depthwise temporal conv (kernel (WINS,1), groups=C, same
    # padding) + residual.
    # TODO(synk): DFSMNEncoderLayer's source is not provided upstream; this is
    # the canonical depthwise-memory + residual formulation. Dropout(0.1) is
    # applied as identity (inference).
    def block_body(i, carry):
        mem = mem_ref[i]                                      # (WINS, H) f32
        center = hbuf_ref[pl.ds(pad, w_tile), :]              # aligned read
        acc = center
        for k in range(WINS):                                 # unrolled taps
            if k == HALF:
                tap = center
            else:
                tap = hbuf_ref[pl.ds(pad + k - HALF, w_tile), :]
            acc = acc + tap * mem[k:k + 1, :]
        # Re-apply the valid mask so zero "same"-padding semantics hold for
        # the next block's taps.
        hbuf_ref[pl.ds(pad, w_tile), :] = acc * valid
        return carry

    lax.fori_loop(0, num_blocks, block_body, 0)

    # Only the central t_tile frames are exact past this point.
    hc = hbuf_ref[pl.ds(pad + halo, t_tile), :].astype(jnp.bfloat16)

    # conv1 (1x1) + BN1 (folded) + ReLU
    h1 = jnp.maximum(
        jnp.dot(hc, w1_ref[...], preferred_element_type=jnp.float32)
        + b1_ref[...], 0.0)
    # conv2 (1x1) + BN2 (folded) + ReLU
    h2 = jnp.maximum(
        jnp.dot(h1.astype(jnp.bfloat16), w2_ref[...],
                preferred_element_type=jnp.float32) + b2_ref[...], 0.0)
    # conv3 (1x1)
    y = jnp.dot(h2.astype(jnp.bfloat16), w3_ref[...],
                preferred_element_type=jnp.float32) + b3_ref[...]

    # torch does .squeeze(-1).transpose(1, 2); our layout already is
    # (t_tile, Cout) per grid point, i.e. the final (B, T, Cout).
    out_ref[0] = y


# ----------------------------------------------------------------------------
# Wrapper: layout glue, BN folding, tiling, pallas_call.
# ----------------------------------------------------------------------------
def fsmn_encoder_forward(inputs_nchw, xs_lens, params, *, num_blocks,
                         t_tile=None):
    """inputs_nchw: (B, Din, T, 3) float32 (PyTorch NCHW convention)."""
    B, Din, T, W3 = inputs_nchw.shape
    assert W3 == 3, "conv0 kernel (1,3) with no padding requires last dim == 3"
    K0 = Din * W3
    H = params["w1"].shape[0]
    Cout = params["w3"].shape[1]

    # Glue: NCHW -> (B, T, Din*3), flattening (ci, w) like the conv0 weight.
    x = jnp.transpose(inputs_nchw, (0, 2, 1, 3)).reshape(B, T, K0)

    # ---- halo for the stacked DFSMN receptive field -------------------------
    halo = _round_up(HALF * num_blocks, 8)
    assert halo >= HALF * num_blocks, "halo must cover the DFSMN receptive field"
    assert _SCRATCH_PAD >= HALF, "scratch pad must cover one block's taps"

    # ---- device-aware tile sizing & VMEM budget -----------------------------
    vmem_cap = _device_vmem_capacity()
    if t_tile is None:
        # 128 MiB parts (v5e/v6e): amortize the halo overcompute with a big
        # tile; 64 MiB parts (v7x): 512 keeps the budget under the clamp.
        t_tile = 1024 if vmem_cap >= 100 * 2**20 else 512
    t_tile = min(t_tile, _round_up(T, 16))
    k_dim = _round_up(K0, 128)            # well-shaped MXU contraction

    # ---- fold BatchNorm into conv weights/biases, cast weights to bf16 -----
    def fold(w, b, scale, shift):
        return ((w * scale).astype(jnp.bfloat16),
                (b * scale + shift).astype(jnp.float32))

    w0, b0 = fold(params["w0"], params["b0"], params["s0"], params["t0"])
    w0 = jnp.pad(w0, ((0, k_dim - K0), (0, 0)))
    w1, b1 = fold(params["w1"], params["b1"], params["s1"], params["t1"])
    w2, b2 = fold(params["w2"], params["b2"], params["s2"], params["t2"])
    w3 = params["w3"].astype(jnp.bfloat16)
    b3 = params["b3"].astype(jnp.float32)
    mem = params["mem"].astype(jnp.float32)

    param_arrays = (w0, b0, mem, w1, b1, w2, b2, w3, b3)
    param_bytes = sum(int(a.size) * a.dtype.itemsize for a in param_arrays)

    def vmem_budget(tt):
        wt = tt + 2 * halo
        return (param_bytes                         # resident weights (1 copy)
                + 2 * wt * k_dim * 2                # x window, double buffered
                + 2 * tt * Cout * 4                 # out tile, double buffered
                + (wt + 2 * _SCRATCH_PAD) * H * 4   # halo'd DFSMN scratch
                + 4 * wt * H * 4                    # live f32 activation copies
                + 4 * 2**20)                        # misc headroom

    while t_tile > 64 and vmem_budget(t_tile) > vmem_cap - 8 * 2**20:
        t_tile //= 2

    t_pad = _round_up(T, t_tile)
    n_t = t_pad // t_tile
    w_tile = t_tile + 2 * halo
    assert w_tile % 8 == 0

    # ---- pre-gather per-tile halo'd windows (perf review item #1) ----------
    # (B, T, K) -> zero-pad -> (B, n_t, w_tile, k_dim); the duplicated halo in
    # HBM is tiny and restores per-tile pipelined DMA.
    x = jnp.pad(x, ((0, 0), (halo, (t_pad - T) + halo), (0, k_dim - K0)))
    x = x.astype(jnp.bfloat16)
    x_win = jnp.stack(
        [x[:, i * t_tile:i * t_tile + w_tile, :] for i in range(n_t)], axis=1)

    operands = (x_win, w0, b0, mem, w1, b1, w2, b2, w3, b3)

    # Grid-invariant params: whole array resident in VMEM via a
    # memory_space-only BlockSpec (single copy, not part of the double-buffered
    # pipeline).  x is the only pipelined input.
    vmem_spec = pl.BlockSpec(memory_space=pltpu.MemorySpace.VMEM)
    in_specs = [pl.BlockSpec((1, 1, w_tile, k_dim), lambda b, t: (b, t, 0, 0))]
    in_specs += [vmem_spec] * (len(operands) - 1)

    vmem_limit = int(min(vmem_cap - 8 * 2**20,
                         max(32 * 2**20, vmem_budget(t_tile))))

    out = pl.pallas_call(
        functools.partial(fsmn_kernel, t_tile=t_tile, halo=halo, seq_len=T,
                          num_blocks=num_blocks),
        out_shape=jax.ShapeDtypeStruct((B, t_pad, Cout), jnp.float32),
        grid_spec=pltpu.PrefetchScalarGridSpec(
            num_scalar_prefetch=0,
            grid=(B, n_t),
            in_specs=in_specs,
            out_specs=pl.BlockSpec((1, t_tile, Cout), lambda b, t: (b, t, 0)),
            scratch_shapes=[
                pltpu.VMEM((w_tile + 2 * _SCRATCH_PAD, H), jnp.float32)]),
        compiler_params=pltpu.CompilerParams(
            dimension_semantics=("parallel", "parallel"),
            vmem_limit_bytes=vmem_limit),
    )(*operands)

    out = out[:, :T, :]
    # masks = ~make_pad_mask(xs_lens).unsqueeze(1): True for valid frames.
    masks = (jnp.arange(T)[None, :] < xs_lens[:, None])[:, None, :]
    return out, masks


# ----------------------------------------------------------------------------
# Deterministic parameter construction + pure-JAX (f32) reference.
# ----------------------------------------------------------------------------
def make_params(key, din, hidden, cout, num_blocks):
    ks = jax.random.split(key, 24)
    n = iter(range(24))

    def nrm(k, shape, scale=0.1):
        return scale * jax.random.normal(k, shape, dtype=jnp.float32)

    def bn_fold(kg, kb, km, kv, c, eps=1e-5):
        gamma = 1.0 + nrm(kg, (c,))
        beta = nrm(kb, (c,))
        mean = nrm(km, (c,))
        var = jax.random.uniform(kv, (c,), minval=0.5, maxval=1.5,
                                 dtype=jnp.float32)
        scale = gamma / jnp.sqrt(var + eps)
        shift = beta - mean * scale
        return scale[None, :], shift[None, :]

    p = {}
    # conv0: torch weight (H, Din, 1, 3) -> (Din*3, H)
    w0 = nrm(ks[next(n)], (hidden, din, 1, 3))
    p["w0"] = w0.reshape(hidden, din * 3).T
    p["b0"] = nrm(ks[next(n)], (1, hidden))
    p["s0"], p["t0"] = bn_fold(ks[next(n)], ks[next(n)], ks[next(n)],
                               ks[next(n)], hidden)
    # DFSMN depthwise memory weights: torch (H, 1, WINS, 1) per layer
    # -> stacked (num_blocks, WINS, H)
    mem = nrm(ks[next(n)], (num_blocks, hidden, WINS))
    p["mem"] = jnp.transpose(mem, (0, 2, 1))
    # conv1 / conv2 (1x1): (H, H, 1, 1) -> (H, H) transposed for x @ W
    w1 = nrm(ks[next(n)], (hidden, hidden))
    p["w1"] = w1.T
    p["b1"] = nrm(ks[next(n)], (1, hidden))
    p["s1"], p["t1"] = bn_fold(ks[next(n)], ks[next(n)], ks[next(n)],
                               ks[next(n)], hidden)
    w2 = nrm(ks[next(n)], (hidden, hidden))
    p["w2"] = w2.T
    p["b2"] = nrm(ks[next(n)], (1, hidden))
    p["s2"], p["t2"] = bn_fold(ks[next(n)], ks[next(n)], ks[next(n)],
                               ks[next(n)], hidden)
    # conv3 (1x1): (Cout, H, 1, 1) -> (H, Cout)
    w3 = nrm(ks[next(n)], (cout, hidden))
    p["w3"] = w3.T
    p["b3"] = nrm(ks[next(n)], (1, cout))
    return p


def fsmn_reference(inputs_nchw, params, *, num_blocks):
    B, Din, T, W3 = inputs_nchw.shape
    x = jnp.transpose(inputs_nchw, (0, 2, 1, 3)).reshape(B, T, Din * W3)
    h = x @ params["w0"] + params["b0"]
    h = h * params["s0"] + params["t0"]
    for i in range(num_blocks):
        hp = jnp.pad(h, ((0, 0), (HALF, HALF), (0, 0)))
        acc = h
        for k in range(WINS):
            acc = acc + hp[:, k:k + T, :] * params["mem"][i, k][None, None, :]
        h = acc
    h = jnp.maximum((h @ params["w1"] + params["b1"]) * params["s1"]
                    + params["t1"], 0.0)
    h = jnp.maximum((h @ params["w2"] + params["b2"]) * params["s2"]
                    + params["t2"], 0.0)
    return h @ params["w3"] + params["b3"]


if __name__ == "__main__":
    B, Din, T = 2, 16, 16
    HIDDEN, COUT = 32, 16          # small stand-ins for [2048, 2048, 2048, 512]
    NUM_BLOCKS = 3                 # small stand-in for num_blocks=10

    key = jax.random.PRNGKey(0)
    k_in, k_par = jax.random.split(key)

    inputs = jax.random.normal(k_in, (B, Din, T, 3), dtype=jnp.float32)  # NCHW
    xs_lens = jnp.array([T, T - 4], dtype=jnp.int32)
    params = make_params(k_par, Din, HIDDEN, COUT, NUM_BLOCKS)

    out, masks = fsmn_encoder_forward(inputs, xs_lens, params,
                                      num_blocks=NUM_BLOCKS)
    out = jax.block_until_ready(out)
    masks = jax.block_until_ready(masks)

    ref = fsmn_reference(inputs, params, num_blocks=NUM_BLOCKS)
    assert out.shape == (B, T, COUT)
    assert masks.shape == (B, 1, T)
    # Kernel runs matmuls with bf16 operands (f32 accumulation); tolerance
    # covers the bf16 quantization vs the pure-f32 reference.
    assert bool(jnp.allclose(out, ref, rtol=3e-2, atol=3e-2))

    print("KERNEL_OK")
</pallas_src>

<mosaic_0001>
module attributes {stable_mosaic.version = 11 : i64} {
  func.func @fsmn_kernel(%arg0: i32, %arg1: i32, %arg2: memref<1x1x48x128xbf16, #tpu.memory_space<vmem>>, %arg3: memref<128x32xbf16, #tpu.memory_space<vmem>>, %arg4: memref<1x32xf32, #tpu.memory_space<vmem>>, %arg5: memref<3x7x32xf32, #tpu.memory_space<vmem>>, %arg6: memref<32x32xbf16, #tpu.memory_space<vmem>>, %arg7: memref<1x32xf32, #tpu.memory_space<vmem>>, %arg8: memref<32x32xbf16, #tpu.memory_space<vmem>>, %arg9: memref<1x32xf32, #tpu.memory_space<vmem>>, %arg10: memref<32x16xbf16, #tpu.memory_space<vmem>>, %arg11: memref<1x16xf32, #tpu.memory_space<vmem>>, %arg12: memref<1x16x16xf32, #tpu.memory_space<vmem>>, %arg13: memref<64x32xf32, #tpu.memory_space<vmem>>) attributes {dimension_semantics = [#tpu.dimension_semantics<parallel>, #tpu.dimension_semantics<parallel>], iteration_bounds = array<i64: 2, 1>, scalar_prefetch = 0 : i64, scratch_operands = 1 : i64, tpu.core_type = #tpu.core_type<tc>, window_params = [{transform_indices = @transform_0, window_bounds = array<i64: 1, 1, 48, 128>}, {pipeline_mode = #tpu.pipeline_mode<synchronous>, transform_indices = @transform_1, window_bounds = array<i64: 128, 32>}, {pipeline_mode = #tpu.pipeline_mode<synchronous>, transform_indices = @transform_2, window_bounds = array<i64: 1, 32>}, {pipeline_mode = #tpu.pipeline_mode<synchronous>, transform_indices = @transform_3, window_bounds = array<i64: 3, 7, 32>}, {pipeline_mode = #tpu.pipeline_mode<synchronous>, transform_indices = @transform_4, window_bounds = array<i64: 32, 32>}, {pipeline_mode = #tpu.pipeline_mode<synchronous>, transform_indices = @transform_5, window_bounds = array<i64: 1, 32>}, {pipeline_mode = #tpu.pipeline_mode<synchronous>, transform_indices = @transform_6, window_bounds = array<i64: 32, 32>}, {pipeline_mode = #tpu.pipeline_mode<synchronous>, transform_indices = @transform_7, window_bounds = array<i64: 1, 32>}, {pipeline_mode = #tpu.pipeline_mode<synchronous>, transform_indices = @transform_8, window_bounds = array<i64: 32, 16>}, {pipeline_mode = #tpu.pipeline_mode<synchronous>, transform_indices = @transform_9, window_bounds = array<i64: 1, 16>}, {transform_indices = @transform_10, window_bounds = array<i64: 1, 16, 16>}]} {
    %c0 = arith.constant 0 : index
    %c0_0 = arith.constant 0 : index
    %c0_1 = arith.constant 0 : index
    %c0_2 = arith.constant 0 : index
    %0 = vector.load %arg2[%c0, %c0_0, %c0_1, %c0_2] : memref<1x1x48x128xbf16, #tpu.memory_space<vmem>>, vector<1x1x48x128xbf16>
    %1 = vector.shape_cast %0 : vector<1x1x48x128xbf16> to vector<48x128xbf16>
    %c0_3 = arith.constant 0 : index
    %c0_4 = arith.constant 0 : index
    %2 = vector.load %arg3[%c0_3, %c0_4] : memref<128x32xbf16, #tpu.memory_space<vmem>>, vector<128x32xbf16>
    %cst = arith.constant dense<0.000000e+00> : vector<48x32xf32>
    %3 = tpu.matmul %1, %2, %cst {dimension_numbers = #tpu.dot_dimension_numbers<[1], [0], [0], [1], [0, 0, 1, 1], [], []>} : vector<48x128xbf16>, vector<128x32xbf16>, vector<48x32xf32> -> vector<48x32xf32>
    %c0_5 = arith.constant 0 : index
    %c0_6 = arith.constant 0 : index
    %4 = vector.load %arg4[%c0_5, %c0_6] : memref<1x32xf32, #tpu.memory_space<vmem>>, vector<1x32xf32>
    %5 = vector.broadcast %4 : vector<1x32xf32> to vector<48x32xf32>
    %6 = arith.addf %3, %5 : vector<48x32xf32>
    %7 = tpu.iota {dimensions = array<i32: 0>} : vector<48x1xi32>
    %c16_i32 = arith.constant 16 : i32
    %8 = arith.muli %arg1, %c16_i32 : i32
    %c16_i32_7 = arith.constant 16 : i32
    %9 = arith.subi %8, %c16_i32_7 : i32
    %10 = vector.broadcast %9 : i32 to vector<48x1xi32>
    %11 = arith.addi %7, %10 : vector<48x1xi32>
    %c0_i32 = arith.constant 0 : i32
    %12 = vector.broadcast %c0_i32 : i32 to vector<48x1xi32>
    %13 = arith.cmpi sge, %11, %12 : vector<48x1xi32>
    %c16_i32_8 = arith.constant 16 : i32
    %14 = vector.broadcast %c16_i32_8 : i32 to vector<48x1xi32>
    %15 = arith.cmpi slt, %11, %14 : vector<48x1xi32>
    %16 = arith.andi %13, %15 : vector<48x1xi1>
    %17 = arith.extui %16 : vector<48x1xi1> to vector<48x1xi32>
    %18 = arith.sitofp %17 : vector<48x1xi32> to vector<48x1xf32>
    %19 = vector.broadcast %18 : vector<48x1xf32> to vector<48x32xf32>
    %20 = arith.mulf %6, %19 : vector<48x32xf32>
    %cst_9 = arith.constant 0.000000e+00 : f32
    %21 = vector.broadcast %cst_9 : f32 to vector<8x32xf32>
    %c0_10 = arith.constant 0 : index
    %c0_11 = arith.constant 0 : index
    %22 = vector.load %arg13[%c0_10, %c0_11] : memref<64x32xf32, #tpu.memory_space<vmem>>, vector<8x32xf32>
    tpu.vector_store %arg13[%c0_10, %c0_11], %21 {strides = array<i32>} : memref<64x32xf32, #tpu.memory_space<vmem>>, vector<8x32xf32>,
    %c56 = arith.constant 56 : index
    %c0_12 = arith.constant 0 : index
    %23 = vector.load %arg13[%c56, %c0_12] : memref<64x32xf32, #tpu.memory_space<vmem>>, vector<8x32xf32>
    tpu.vector_store %arg13[%c56, %c0_12], %21 {strides = array<i32>} : memref<64x32xf32, #tpu.memory_space<vmem>>, vector<8x32xf32>,
    %c8 = arith.constant 8 : index
    %c0_13 = arith.constant 0 : index
    %24 = vector.load %arg13[%c8, %c0_13] : memref<64x32xf32, #tpu.memory_space<vmem>>, vector<48x32xf32>
    tpu.vector_store %arg13[%c8, %c0_13], %20 {strides = array<i32>} : memref<64x32xf32, #tpu.memory_space<vmem>>, vector<48x32xf32>,
    %c0_i32_14 = arith.constant 0 : i32
    %c3_i32 = arith.constant 3 : i32
    %25 = arith.addi %c0_i32_14, %c3_i32 : i32
    %c1_i32 = arith.constant 1 : i32
    scf.for %arg14 = %c0_i32_14 to %25 step %c1_i32  : i32 {
      %52 = arith.index_cast %arg14 : i32 to index
      %c0_37 = arith.constant 0 : index
      %c0_38 = arith.constant 0 : index
      %53 = vector.load %arg5[%52, %c0_37, %c0_38] : memref<3x7x32xf32, #tpu.memory_space<vmem>>, vector<1x7x32xf32>
      %54 = vector.shape_cast %53 : vector<1x7x32xf32> to vector<7x32xf32>
      %c8_39 = arith.constant 8 : index
      %c0_40 = arith.constant 0 : index
      %55 = vector.load %arg13[%c8_39, %c0_40] : memref<64x32xf32, #tpu.memory_space<vmem>>, vector<48x32xf32>
      %c5 = arith.constant 5 : index
      %c0_41 = arith.constant 0 : index
      %56 = vector.load %arg13[%c5, %c0_41] : memref<64x32xf32, #tpu.memory_space<vmem>>, vector<48x32xf32>
      %57 = vector.extract_strided_slice %54 {offsets = [0, 0], sizes = [1, 32], strides = [1, 1]} : vector<7x32xf32> to vector<1x32xf32>
      %58 = vector.broadcast %57 : vector<1x32xf32> to vector<48x32xf32>
      %59 = arith.mulf %56, %58 : vector<48x32xf32>
      %60 = arith.addf %55, %59 : vector<48x32xf32>
      %c6 = arith.constant 6 : index
      %c0_42 = arith.constant 0 : index
      %61 = vector.load %arg13[%c6, %c0_42] : memref<64x32xf32, #tpu.memory_space<vmem>>, vector<48x32xf32>
      %62 = vector.extract_strided_slice %54 {offsets = [1, 0], sizes = [1, 32], strides = [1, 1]} : vector<7x32xf32> to vector<1x32xf32>
      %63 = vector.broadcast %62 : vector<1x32xf32> to vector<48x32xf32>
      %64 = arith.mulf %61, %63 : vector<48x32xf32>
      %65 = arith.addf %60, %64 : vector<48x32xf32>
      %c7 = arith.constant 7 : index
      %c0_43 = arith.constant 0 : index
      %66 = vector.load %arg13[%c7, %c0_43] : memref<64x32xf32, #tpu.memory_space<vmem>>, vector<48x32xf32>
      %67 = vector.extract_strided_slice %54 {offsets = [2, 0], sizes = [1, 32], strides = [1, 1]} : vector<7x32xf32> to vector<1x32xf32>
      %68 = vector.broadcast %67 : vector<1x32xf32> to vector<48x32xf32>
      %69 = arith.mulf %66, %68 : vector<48x32xf32>
      %70 = arith.addf %65, %69 : vector<48x32xf32>
      %71 = vector.extract_strided_slice %54 {offsets = [3, 0], sizes = [1, 32], strides = [1, 1]} : vector<7x32xf32> to vector<1x32xf32>
      %72 = vector.broadcast %71 : vector<1x32xf32> to vector<48x32xf32>
      %73 = arith.mulf %55, %72 : vector<48x32xf32>
      %74 = arith.addf %70, %73 : vector<48x32xf32>
      %c9 = arith.constant 9 : index
      %c0_44 = arith.constant 0 : index
      %75 = vector.load %arg13[%c9, %c0_44] : memref<64x32xf32, #tpu.memory_space<vmem>>, vector<48x32xf32>
      %76 = vector.extract_strided_slice %54 {offsets = [4, 0], sizes = [1, 32], strides = [1, 1]} : vector<7x32xf32> to vector<1x32xf32>
      %77 = vector.broadcast %76 : vector<1x32xf32> to vector<48x32xf32>
      %78 = arith.mulf %75, %77 : vector<48x32xf32>
      %79 = arith.addf %74, %78 : vector<48x32xf32>
      %c10 = arith.constant 10 : index
      %c0_45 = arith.constant 0 : index
      %80 = vector.load %arg13[%c10, %c0_45] : memref<64x32xf32, #tpu.memory_space<vmem>>, vector<48x32xf32>
      %81 = vector.extract_strided_slice %54 {offsets = [5, 0], sizes = [1, 32], strides = [1, 1]} : vector<7x32xf32> to vector<1x32xf32>
      %82 = vector.broadcast %81 : vector<1x32xf32> to vector<48x32xf32>
      %83 = arith.mulf %80, %82 : vector<48x32xf32>
      %84 = arith.addf %79, %83 : vector<48x32xf32>
      %c11 = arith.constant 11 : index
      %c0_46 = arith.constant 0 : index
      %85 = vector.load %arg13[%c11, %c0_46] : memref<64x32xf32, #tpu.memory_space<vmem>>, vector<48x32xf32>
      %86 = vector.extract_strided_slice %54 {offsets = [6, 0], sizes = [1, 32], strides = [1, 1]} : vector<7x32xf32> to vector<1x32xf32>
      %87 = vector.broadcast %86 : vector<1x32xf32> to vector<48x32xf32>
      %88 = arith.mulf %85, %87 : vector<48x32xf32>
      %89 = arith.addf %84, %88 : vector<48x32xf32>
      %90 = vector.broadcast %18 : vector<48x1xf32> to vector<48x32xf32>
      %91 = arith.mulf %89, %90 : vector<48x32xf32>
      %c8_47 = arith.constant 8 : index
      %c0_48 = arith.constant 0 : index
      %92 = vector.load %arg13[%c8_47, %c0_48] : memref<64x32xf32, #tpu.memory_space<vmem>>, vector<48x32xf32>
      tpu.vector_store %arg13[%c8_47, %c0_48], %91 {strides = array<i32>} : memref<64x32xf32, #tpu.memory_space<vmem>>, vector<48x32xf32>,
    }
    %c3_i32_15 = arith.constant 3 : i32
    %c24 = arith.constant 24 : index
    %c0_16 = arith.constant 0 : index
    %26 = vector.load %arg13[%c24, %c0_16] : memref<64x32xf32, #tpu.memory_space<vmem>>, vector<16x32xf32>
    %27 = arith.truncf %26 : vector<16x32xf32> to vector<16x32xbf16>
    %c0_17 = arith.constant 0 : index
    %c0_18 = arith.constant 0 : index
    %28 = vector.load %arg6[%c0_17, %c0_18] : memref<32x32xbf16, #tpu.memory_space<vmem>>, vector<32x32xbf16>
    %cst_19 = arith.constant dense<0.000000e+00> : vector<16x32xf32>
    %29 = tpu.matmul %27, %28, %cst_19 {dimension_numbers = #tpu.dot_dimension_numbers<[1], [0], [0], [1], [0, 0, 1, 1], [], []>} : vector<16x32xbf16>, vector<32x32xbf16>, vector<16x32xf32> -> vector<16x32xf32>
    %c0_20 = arith.constant 0 : index
    %c0_21 = arith.constant 0 : index
    %30 = vector.load %arg7[%c0_20, %c0_21] : memref<1x32xf32, #tpu.memory_space<vmem>>, vector<1x32xf32>
    %31 = vector.broadcast %30 : vector<1x32xf32> to vector<16x32xf32>
    %32 = arith.addf %29, %31 : vector<16x32xf32>
    %cst_22 = arith.constant 0.000000e+00 : f32
    %33 = vector.broadcast %cst_22 : f32 to vector<16x32xf32>
    %34 = arith.maximumf %32, %33 : vector<16x32xf32>
    %35 = arith.truncf %34 : vector<16x32xf32> to vector<16x32xbf16>
    %c0_23 = arith.constant 0 : index
    %c0_24 = arith.constant 0 : index
    %36 = vector.load %arg8[%c0_23, %c0_24] : memref<32x32xbf16, #tpu.memory_space<vmem>>, vector<32x32xbf16>
    %cst_25 = arith.constant dense<0.000000e+00> : vector<16x32xf32>
    %37 = tpu.matmul %35, %36, %cst_25 {dimension_numbers = #tpu.dot_dimension_numbers<[1], [0], [0], [1], [0, 0, 1, 1], [], []>} : vector<16x32xbf16>, vector<32x32xbf16>, vector<16x32xf32> -> vector<16x32xf32>
    %c0_26 = arith.constant 0 : index
    %c0_27 = arith.constant 0 : index
    %38 = vector.load %arg9[%c0_26, %c0_27] : memref<1x32xf32, #tpu.memory_space<vmem>>, vector<1x32xf32>
    %39 = vector.broadcast %38 : vector<1x32xf32> to vector<16x32xf32>
    %40 = arith.addf %37, %39 : vector<16x32xf32>
    %cst_28 = arith.constant 0.000000e+00 : f32
    %41 = vector.broadcast %cst_28 : f32 to vector<16x32xf32>
    %42 = arith.maximumf %40, %41 : vector<16x32xf32>
    %43 = arith.truncf %42 : vector<16x32xf32> to vector<16x32xbf16>
    %c0_29 = arith.constant 0 : index
    %c0_30 = arith.constant 0 : index
    %44 = vector.load %arg10[%c0_29, %c0_30] : memref<32x16xbf16, #tpu.memory_space<vmem>>, vector<32x16xbf16>
    %cst_31 = arith.constant dense<0.000000e+00> : vector<16x16xf32>
    %45 = tpu.matmul %43, %44, %cst_31 {dimension_numbers = #tpu.dot_dimension_numbers<[1], [0], [0], [1], [0, 0, 1, 1], [], []>} : vector<16x32xbf16>, vector<32x16xbf16>, vector<16x16xf32> -> vector<16x16xf32>
    %c0_32 = arith.constant 0 : index
    %c0_33 = arith.constant 0 : index
    %46 = vector.load %arg11[%c0_32, %c0_33] : memref<1x16xf32, #tpu.memory_space<vmem>>, vector<1x16xf32>
    %47 = vector.broadcast %46 : vector<1x16xf32> to vector<16x16xf32>
    %48 = arith.addf %45, %47 : vector<16x16xf32>
    %c0_34 = arith.constant 0 : index
    %c0_35 = arith.constant 0 : index
    %c0_36 = arith.constant 0 : index
    %49 = vector.load %arg12[%c0_34, %c0_35, %c0_36] : memref<1x16x16xf32, #tpu.memory_space<vmem>>, vector<1x16x16xf32>
    %50 = vector.shape_cast %49 : vector<1x16x16xf32> to vector<16x16xf32>
    %51 = vector.shape_cast %48 : vector<16x16xf32> to vector<1x16x16xf32>
    tpu.vector_store %arg12[%c0_34, %c0_35, %c0_36], %51 {strides = array<i32>} : memref<1x16x16xf32, #tpu.memory_space<vmem>>, vector<1x16x16xf32>,
    return
  }
  func.func @transform_0(%arg0: i32, %arg1: i32) -> (i32, i32, i32, i32) {
    %c0_i32 = arith.constant 0 : i32
    %c0_i32_0 = arith.constant 0 : i32
    %c0_i32_1 = arith.constant 0 : i32
    return %arg0, %arg1, %c0_i32, %c0_i32_0 : i32, i32, i32, i32
  }
  func.func @transform_1(%arg0: i32, %arg1: i32) -> (i32, i32) {
    %c0_i32 = arith.constant 0 : i32
    %c0_i32_0 = arith.constant 0 : i32
    %c0_i32_1 = arith.constant 0 : i32
    return %c0_i32, %c0_i32_0 : i32, i32
  }
  func.func @transform_2(%arg0: i32, %arg1: i32) -> (i32, i32) {
    %c0_i32 = arith.constant 0 : i32
    %c0_i32_0 = arith.constant 0 : i32
    %c0_i32_1 = arith.constant 0 : i32
    return %c0_i32, %c0_i32_0 : i32, i32
  }
  func.func @transform_3(%arg0: i32, %arg1: i32) -> (i32, i32, i32) {
    %c0_i32 = arith.constant 0 : i32
    %c0_i32_0 = arith.constant 0 : i32
    %c0_i32_1 = arith.constant 0 : i32
    %c0_i32_2 = arith.constant 0 : i32
    return %c0_i32, %c0_i32_0, %c0_i32_1 : i32, i32, i32
  }
  func.func @transform_4(%arg0: i32, %arg1: i32) -> (i32, i32) {
    %c0_i32 = arith.constant 0 : i32
    %c0_i32_0 = arith.constant 0 : i32
    %c0_i32_1 = arith.constant 0 : i32
    return %c0_i32, %c0_i32_0 : i32, i32
  }
  func.func @transform_5(%arg0: i32, %arg1: i32) -> (i32, i32) {
    %c0_i32 = arith.constant 0 : i32
    %c0_i32_0 = arith.constant 0 : i32
    %c0_i32_1 = arith.constant 0 : i32
    return %c0_i32, %c0_i32_0 : i32, i32
  }
  func.func @transform_6(%arg0: i32, %arg1: i32) -> (i32, i32) {
    %c0_i32 = arith.constant 0 : i32
    %c0_i32_0 = arith.constant 0 : i32
    %c0_i32_1 = arith.constant 0 : i32
    return %c0_i32, %c0_i32_0 : i32, i32
  }
  func.func @transform_7(%arg0: i32, %arg1: i32) -> (i32, i32) {
    %c0_i32 = arith.constant 0 : i32
    %c0_i32_0 = arith.constant 0 : i32
    %c0_i32_1 = arith.constant 0 : i32
    return %c0_i32, %c0_i32_0 : i32, i32
  }
  func.func @transform_8(%arg0: i32, %arg1: i32) -> (i32, i32) {
    %c0_i32 = arith.constant 0 : i32
    %c0_i32_0 = arith.constant 0 : i32
    %c0_i32_1 = arith.constant 0 : i32
    return %c0_i32, %c0_i32_0 : i32, i32
  }
  func.func @transform_9(%arg0: i32, %arg1: i32) -> (i32, i32) {
    %c0_i32 = arith.constant 0 : i32
    %c0_i32_0 = arith.constant 0 : i32
    %c0_i32_1 = arith.constant 0 : i32
    return %c0_i32, %c0_i32_0 : i32, i32
  }
  func.func @transform_10(%arg0: i32, %arg1: i32) -> (i32, i32, i32) {
    %c0_i32 = arith.constant 0 : i32
    %c0_i32_0 = arith.constant 0 : i32
    return %arg0, %arg1, %c0_i32 : i32, i32, i32
  }
}

</mosaic_0001>

<llo_original>
// kernel: tpu_custom_call.1
$region0: #{tpu_custom_call.1}
  #allocation0 [shape = 'u32[]', space=smem, size = 0x4, offset = 0x4, fixed_abs, tag = 'smem constant byte address 0x4 - core index']
  #allocation1 [shape = 'u32[72,128]{1,0:T(1,128)}', space=vmem, size = 0x9000, scoped, tag = 'internal scratch']
  #allocation2 [shape = 'f32[64,32]{1,0:T(8,128)}', space=vmem, size = 0x8000, scoped, tag = 'scratch operand']
  %s0 = inlined_call_operand.vmem [shape: bf16[2,1,48,128], index: 0, kind: input, shape index: {}]
  %s1 = inlined_call_operand.vmem [shape: bf16[128,32], index: 1, kind: input, shape index: {}]
  %s2 = inlined_call_operand.vmem [shape: f32[1,32], index: 2, kind: input, shape index: {}]
  %s3 = inlined_call_operand.vmem [shape: f32[3,7,32], index: 3, kind: input, shape index: {}]
  %s4 = inlined_call_operand.vmem [shape: bf16[32,32], index: 4, kind: input, shape index: {}]
  %s5 = inlined_call_operand.vmem [shape: f32[1,32], index: 5, kind: input, shape index: {}]
  %s6 = inlined_call_operand.hbm [shape: bf16[32,32], index: 6, kind: input, shape index: {}]
  %s7 = inlined_call_operand.vmem [shape: f32[1,32], index: 7, kind: input, shape index: {}]
  %s8 = inlined_call_operand.vmem [shape: bf16[32,16], index: 8, kind: input, shape index: {}]
  %s9 = inlined_call_operand.vmem [shape: f32[1,16], index: 9, kind: input, shape index: {}]
  %s10 = inlined_call_operand.hbm [shape: f32[2,16,16], index: 10, kind: output, shape index: {}]
  %s11 = sld [smem:[#allocation0]]
  $region84: #{tpu_custom_call.1} parent=0
    _
  %s13 = ssub.s32 1, %s11
  %s14 = scalar_select 0, %s13, %s11
  $region1: #{tpu_custom_call.1} parent=0
    #allocation3 [shape = 'u8[8192]{0}', space=vmem, size = 0x2000, scoped, tag = 'input window, operand 6, single buffered']
    #allocation4 [shape = 's32[2]{0}', space=sflag, size = 0x8, scoped, tag = 'scoped memory for tpu_custom_call.1']
    #allocation5 [shape = 's32[2]{0}', space=sflag, size = 0x8, scoped, tag = 'scoped memory for tpu_custom_call.1']
    #allocation6 [shape = 'u8[16384]{0}', space=vmem, size = 0x4000, scoped, tag = 'output window, operand 0']
    %15 = vsyncpa [#allocation4], 0
    %16 = vsyncpa [#allocation5], 0
    %s17 = scalar_lea.sflag [#allocation5], 1
    %18 = vsyncpa %s17, 0
    loop: start=0, step=1, limit=4
    $region2: #{tpu_custom_call.1} parent=1 // loop_pre_header
      _
    $region3: #{tpu_custom_call.1} parent=1 // loop_header
      %s20 = sphi 0, %s24
      %p21 = scmp.ge.s32.totalorder %s20, 4
      %s27 = sphi 0, %s39
      %s28 = sphi 0, %s35
      %s29 = sphi 0, %s27
      %s30 = sphi 0, %s28
      %s31 = sphi 0, %s29
      %s32 = sphi 0, %s30
      %s44 = sphi 0, %s46
      %s47 = sphi 0, %s44
      %s48 = sphi 0, %s47
      %s64 = sphi 0, %s48
      %s68 = sphi 0, %s68
      %s70 = sphi 0, %s68
      %s71 = sphi 0, %s70
      %s85 = sphi 0, %s71
      %s89 = sphi 0, %s89
      %s91 = sphi 0, %s89
      %s92 = sphi 0, %s91
      %s106 = sphi 0, %s92
      %s110 = sphi 0, %s110
      %s112 = sphi 0, %s110
      %s113 = sphi 0, %s112
      %s127 = sphi 0, %s113
      %s131 = sphi 0, %s131
      %s133 = sphi 0, %s131
      %s134 = sphi 0, %s133
      %s148 = sphi 0, %s134
      %s152 = sphi 0, %s152
      %s154 = sphi 0, %s152
      %s155 = sphi 0, %s154
      %s169 = sphi 0, %s155
      %s173 = sphi 0, %s173
      %s175 = sphi 0, %s173
      %s176 = sphi 0, %s175
      %s190 = sphi 0, %s176
      %s194 = sphi 0, %s194
      %s196 = sphi 0, %s194
      %s197 = sphi 0, %s196
      %s211 = sphi 0, %s197
      %s215 = sphi 0, %s215
      %s217 = sphi 0, %s215
      %s218 = sphi 0, %s217
      %s232 = sphi 0, %s218
      %s236 = sphi 0, %s236
      %s238 = sphi 0, %s236
      %s239 = sphi 0, %s238
      %s253 = sphi 0, %s239
      %s261 = sphi 0, %s263
      %s264 = sphi 0, %s261
      %s265 = sphi 0, %s264
      %s281 = sphi 0, %s265
    $region4: #{tpu_custom_call.1} parent=1 // loop_header_branch
      %23 = sbr.rel (%p21) target = $region8
    $region5: #{tpu_custom_call.1} parent=1 // loop_body
      %s25 = ssub.s32 %s20, 1
      %s26 = ssub.s32 %s20, 2
      %s33 = sadd.s32 1, %s28
      %p34 = scmp.ge.s32.totalorder %s33, 1
      %s35 = scalar_select %p34, 0, %s33
      %s36 = sadd.s32 1, %s27
      %s37 = scalar_select %p34, %s36, %s27
      %p38 = scmp.ge.s32.totalorder %s37, 2
      %s39 = scalar_select %p38, 0, %s37
      %s40 = ssub.s32 %s27, %s39
      %s41 = ssub.s32 %s28, %s35
      %s42 = sor.u32 %s40, %s41
      %p43 = scmp.eq.s32.totalorder %s42, 0
      %s45 = sadd.s32 %s44, 1
      %s46 = scalar_select %p43, %s44, %s45
      %p49 = pneg %p43
      %p50 = scmp.eq.s32.totalorder %s20, 1
      %p51 = por %p49, %p50
      %p52 = scmp.ne.s32.totalorder %s44, %s47
      %p53 = scmp.eq.s32.totalorder %s20, 0
      %p54 = por %p52, %p53
      %p55 = scmp.ne.s32.totalorder %s44, %s47
      %p56 = scmp.eq.s32.totalorder %s25, 1
      %p57 = por %p55, %p56
      %p58 = scmp.ne.s32.totalorder %s47, %s48
      %p59 = scmp.eq.s32.totalorder %s25, 0
      %p60 = por %p58, %p59
      %p61 = scmp.ne.s32.totalorder %s47, %s48
      %p62 = scmp.eq.s32.totalorder %s26, 1
      %p63 = por %p61, %p62
      %p65 = scmp.ne.s32.totalorder %s48, %s64
      %p66 = scmp.eq.s32.totalorder %s26, 0
      %p67 = por %p65, %p66
      %s69 = sadd.s32 %s68, 1
      %p72 = scmp.eq.s32.totalorder %s20, 1
      %p73 = scmp.ne.s32.totalorder %s68, %s70
      %p74 = scmp.eq.s32.totalorder %s20, 0
      %p75 = por %p73, %p74
      %p76 = scmp.ne.s32.totalorder %s68, %s70
      %p77 = scmp.eq.s32.totalorder %s25, 1
      %p78 = por %p76, %p77
      %p79 = scmp.ne.s32.totalorder %s70, %s71
      %p80 = scmp.eq.s32.totalorder %s25, 0
      %p81 = por %p79, %p80
      %p82 = scmp.ne.s32.totalorder %s70, %s71
      %p83 = scmp.eq.s32.totalorder %s26, 1
      %p84 = por %p82, %p83
      %p86 = scmp.ne.s32.totalorder %s71, %s85
      %p87 = scmp.eq.s32.totalorder %s26, 0
      %p88 = por %p86, %p87
      %s90 = sadd.s32 %s89, 1
      %p93 = scmp.eq.s32.totalorder %s20, 1
      %p94 = scmp.ne.s32.totalorder %s89, %s91
      %p95 = scmp.eq.s32.totalorder %s20, 0
      %p96 = por %p94, %p95
      %p97 = scmp.ne.s32.totalorder %s89, %s91
      %p98 = scmp.eq.s32.totalorder %s25, 1
      %p99 = por %p97, %p98
      %p100 = scmp.ne.s32.totalorder %s91, %s92
      %p101 = scmp.eq.s32.totalorder %s25, 0
      %p102 = por %p100, %p101
      %p103 = scmp.ne.s32.totalorder %s91, %s92
      %p104 = scmp.eq.s32.totalorder %s26, 1
      %p105 = por %p103, %p104
      %p107 = scmp.ne.s32.totalorder %s92, %s106
      %p108 = scmp.eq.s32.totalorder %s26, 0
      %p109 = por %p107, %p108
      %s111 = sadd.s32 %s110, 1
      %p114 = scmp.eq.s32.totalorder %s20, 1
      %p115 = scmp.ne.s32.totalorder %s110, %s112
      %p116 = scmp.eq.s32.totalorder %s20, 0
      %p117 = por %p115, %p116
      %p118 = scmp.ne.s32.totalorder %s110, %s112
      %p119 = scmp.eq.s32.totalorder %s25, 1
      %p120 = por %p118, %p119
      %p121 = scmp.ne.s32.totalorder %s112, %s113
      %p122 = scmp.eq.s32.totalorder %s25, 0
      %p123 = por %p121, %p122
      %p124 = scmp.ne.s32.totalorder %s112, %s113
      %p125 = scmp.eq.s32.totalorder %s26, 1
      %p126 = por %p124, %p125
      %p128 = scmp.ne.s32.totalorder %s113, %s127
      %p129 = scmp.eq.s32.totalorder %s26, 0
      %p130 = por %p128, %p129
      %s132 = sadd.s32 %s131, 1
      %p135 = scmp.eq.s32.totalorder %s20, 1
      %p136 = scmp.ne.s32.totalorder %s131, %s133
      %p137 = scmp.eq.s32.totalorder %s20, 0
      %p138 = por %p136, %p137
      %p139 = scmp.ne.s32.totalorder %s131, %s133
      %p140 = scmp.eq.s32.totalorder %s25, 1
      %p141 = por %p139, %p140
      %p142 = scmp.ne.s32.totalorder %s133, %s134
      %p143 = scmp.eq.s32.totalorder %s25, 0
      %p144 = por %p142, %p143
      %p145 = scmp.ne.s32.totalorder %s133, %s134
      %p146 = scmp.eq.s32.totalorder %s26, 1
      %p147 = por %p145, %p146
      %p149 = scmp.ne.s32.totalorder %s134, %s148
      %p150 = scmp.eq.s32.totalorder %s26, 0
      %p151 = por %p149, %p150
      %s153 = sadd.s32 %s152, 1
      %p156 = scmp.eq.s32.totalorder %s20, 1
      %p157 = scmp.ne.s32.totalorder %s152, %s154
      %p158 = scmp.eq.s32.totalorder %s20, 0
      %p159 = por %p157, %p158
      %p160 = scmp.ne.s32.totalorder %s152, %s154
      %p161 = scmp.eq.s32.totalorder %s25, 1
      %p162 = por %p160, %p161
      %p163 = scmp.ne.s32.totalorder %s154, %s155
      %p164 = scmp.eq.s32.totalorder %s25, 0
      %p165 = por %p163, %p164
      %p166 = scmp.ne.s32.totalorder %s154, %s155
      %p167 = scmp.eq.s32.totalorder %s26, 1
      %p168 = por %p166, %p167
      %p170 = scmp.ne.s32.totalorder %s155, %s169
      %p171 = scmp.eq.s32.totalorder %s26, 0
      %p172 = por %p170, %p171
      %s174 = sadd.s32 %s173, 1
      %p177 = scmp.eq.s32.totalorder %s20, 1
      %p178 = scmp.ne.s32.totalorder %s173, %s175
      %p179 = scmp.eq.s32.totalorder %s20, 0
      %p180 = por %p178, %p179
      %p181 = scmp.ne.s32.totalorder %s173, %s175
      %p182 = scmp.eq.s32.totalorder %s25, 1
      %p183 = por %p181, %p182
      %p184 = scmp.ne.s32.totalorder %s175, %s176
      %p185 = scmp.eq.s32.totalorder %s25, 0
      %p186 = por %p184, %p185
      %p187 = scmp.ne.s32.totalorder %s175, %s176
      %p188 = scmp.eq.s32.totalorder %s26, 1
      %p189 = por %p187, %p188
      %p191 = scmp.ne.s32.totalorder %s176, %s190
      %p192 = scmp.eq.s32.totalorder %s26, 0
      %p193 = por %p191, %p192
      %s195 = sadd.s32 %s194, 1
      %p198 = scmp.eq.s32.totalorder %s20, 1
      %p199 = scmp.ne.s32.totalorder %s194, %s196
      %p200 = scmp.eq.s32.totalorder %s20, 0
      %p201 = por %p199, %p200
      %p202 = scmp.ne.s32.totalorder %s194, %s196
      %p203 = scmp.eq.s32.totalorder %s25, 1
      %p204 = por %p202, %p203
      %p205 = scmp.ne.s32.totalorder %s196, %s197
      %p206 = scmp.eq.s32.totalorder %s25, 0
      %p207 = por %p205, %p206
      %p208 = scmp.ne.s32.totalorder %s196, %s197
      %p209 = scmp.eq.s32.totalorder %s26, 1
      %p210 = por %p208, %p209
      %p212 = scmp.ne.s32.totalorder %s197, %s211
      %p213 = scmp.eq.s32.totalorder %s26, 0
      %p214 = por %p212, %p213
      %s216 = sadd.s32 %s215, 1
      %p219 = scmp.eq.s32.totalorder %s20, 1
      %p220 = scmp.ne.s32.totalorder %s215, %s217
      %p221 = scmp.eq.s32.totalorder %s20, 0
      %p222 = por %p220, %p221
      %p223 = scmp.ne.s32.totalorder %s215, %s217
      %p224 = scmp.eq.s32.totalorder %s25, 1
      %p225 = por %p223, %p224
      %p226 = scmp.ne.s32.totalorder %s217, %s218
      %p227 = scmp.eq.s32.totalorder %s25, 0
      %p228 = por %p226, %p227
      %p229 = scmp.ne.s32.totalorder %s217, %s218
      %p230 = scmp.eq.s32.totalorder %s26, 1
      %p231 = por %p229, %p230
      %p233 = scmp.ne.s32.totalorder %s218, %s232
      %p234 = scmp.eq.s32.totalorder %s26, 0
      %p235 = por %p233, %p234
      %s237 = sadd.s32 %s236, 1
      %p240 = scmp.eq.s32.totalorder %s20, 1
      %p241 = scmp.ne.s32.totalorder %s236, %s238
      %p242 = scmp.eq.s32.totalorder %s20, 0
      %p243 = por %p241, %p242
      %p244 = scmp.ne.s32.totalorder %s236, %s238
      %p245 = scmp.eq.s32.totalorder %s25, 1
      %p246 = por %p244, %p245
      %p247 = scmp.ne.s32.totalorder %s238, %s239
      %p248 = scmp.eq.s32.totalorder %s25, 0
      %p249 = por %p247, %p248
      %p250 = scmp.ne.s32.totalorder %s238, %s239
      %p251 = scmp.eq.s32.totalorder %s26, 1
      %p252 = por %p250, %p251
      %p254 = scmp.ne.s32.totalorder %s239, %s253
      %p255 = scmp.eq.s32.totalorder %s26, 0
      %p256 = por %p254, %p255
      %s257 = ssub.s32 %s27, %s39
      %s258 = ssub.s32 %s28, %s35
      %s259 = sor.u32 %s257, %s258
      %p260 = scmp.eq.s32.totalorder %s259, 0
      %s262 = sadd.s32 %s261, 1
      %s263 = scalar_select %p260, %s261, %s262
      %p266 = pneg %p260
      %p267 = scmp.eq.s32.totalorder %s20, 1
      %p268 = por %p266, %p267
      %p269 = scmp.ne.s32.totalorder %s261, %s264
      %p270 = scmp.eq.s32.totalorder %s20, 0
      %p271 = por %p269, %p270
      %p272 = scmp.ne.s32.totalorder %s261, %s264
      %p273 = scmp.eq.s32.totalorder %s25, 1
      %p274 = por %p272, %p273
      %p275 = scmp.ne.s32.totalorder %s264, %s265
      %p276 = scmp.eq.s32.totalorder %s25, 0
      %p277 = por %p275, %p276
      %p278 = scmp.ne.s32.totalorder %s264, %s265
      %p279 = scmp.eq.s32.totalorder %s26, 1
      %p280 = por %p278, %p279
      %p282 = scmp.ne.s32.totalorder %s265, %s281
      %p283 = scmp.eq.s32.totalorder %s26, 0
      %p284 = por %p282, %p283
      %p285 = scmp.le.s32.totalorder 1, %s20
      %p286 = scmp.lt.s32.totalorder %s20, 3
      %p287 = pnand %p285, %p286
      %p288 = pneg %p287
      // Predicated region
      $region9: #{tpu_custom_call.1} parent=5 // pred_check
        _
      $region10: #{tpu_custom_call.1} parent=5 // pred_check_branch
        %290 = sbr.rel (%p287) target = $region12
      $region11: #{tpu_custom_call.1} parent=5 // pred_region
        %s291 = ssub.s32 %s20, 1
        // Predicated region
        $region13: #{tpu_custom_call.1} parent=11 // pred_check
          %p292 = pneg %p81
        $region14: #{tpu_custom_call.1} parent=11 // pred_check_branch
          %294 = sbr.rel (%p292) target = $region16
        $region15: #{tpu_custom_call.1} parent=11 // pred_region
          _
        $region16: #{tpu_custom_call.1} parent=11 // pred_fallthru
          _
        // Predicated region
        $region17: #{tpu_custom_call.1} parent=11 // pred_check
          %p295 = pneg %p102
        $region18: #{tpu_custom_call.1} parent=11 // pred_check_branch
          %297 = sbr.rel (%p295) target = $region20
        $region19: #{tpu_custom_call.1} parent=11 // pred_region
          _
        $region20: #{tpu_custom_call.1} parent=11 // pred_fallthru
          _
        // Predicated region
        $region21: #{tpu_custom_call.1} parent=11 // pred_check
          %p298 = pneg %p123
        $region22: #{tpu_custom_call.1} parent=11 // pred_check_branch
          %300 = sbr.rel (%p298) target = $region24
        $region23: #{tpu_custom_call.1} parent=11 // pred_region
          _
        $region24: #{tpu_custom_call.1} parent=11 // pred_fallthru
          _
        // Predicated region
        $region25: #{tpu_custom_call.1} parent=11 // pred_check
          %p301 = pneg %p144
        $region26: #{tpu_custom_call.1} parent=11 // pred_check_branch
          %303 = sbr.rel (%p301) target = $region28
        $region27: #{tpu_custom_call.1} parent=11 // pred_region
          _
        $region28: #{tpu_custom_call.1} parent=11 // pred_fallthru
          _
        // Predicated region
        $region29: #{tpu_custom_call.1} parent=11 // pred_check
          %p304 = pneg %p165
        $region30: #{tpu_custom_call.1} parent=11 // pred_check_branch
          %306 = sbr.rel (%p304) target = $region32
        $region31: #{tpu_custom_call.1} parent=11 // pred_region
          _
        $region32: #{tpu_custom_call.1} parent=11 // pred_fallthru
          _
        // Predicated region
        $region33: #{tpu_custom_call.1} parent=11 // pred_check
          %p307 = pneg %p186
        $region34: #{tpu_custom_call.1} parent=11 // pred_check_branch
          %309 = sbr.rel (%p307) target = $region36
        $region35: #{tpu_custom_call.1} parent=11 // pred_region
          %311 = vsyncadd [#allocation4], 0
          %s312 = sshll.u32 %s6, 4
          %s313 = int_to_ptr.hbm [resolvable:$true] %s312
          %s314 = sshll.u32 [#allocation3], 4
          %s315 = int_to_ptr.vmem [resolvable:$true] %s314
          %320 = dma.hbm_to_vmem [thread:$0]  %s313, 256, %s315, [#allocation4], 64, 64, 4
        $region36: #{tpu_custom_call.1} parent=11 // pred_fallthru
          _
        // Predicated region
        $region37: #{tpu_custom_call.1} parent=11 // pred_check
          %p321 = pneg %p207
        $region38: #{tpu_custom_call.1} parent=11 // pred_check_branch
          %323 = sbr.rel (%p321) target = $region40
        $region39: #{tpu_custom_call.1} parent=11 // pred_region
          _
        $region40: #{tpu_custom_call.1} parent=11 // pred_fallthru
          _
        // Predicated region
        $region41: #{tpu_custom_call.1} parent=11 // pred_check
          %p324 = pneg %p228
        $region42: #{tpu_custom_call.1} parent=11 // pred_check_branch
          %326 = sbr.rel (%p324) target = $region44
        $region43: #{tpu_custom_call.1} parent=11 // pred_region
          _
        $region44: #{tpu_custom_call.1} parent=11 // pred_fallthru
          _
        // Predicated region
        $region45: #{tpu_custom_call.1} parent=11 // pred_check
          %p327 = pneg %p249
        $region46: #{tpu_custom_call.1} parent=11 // pred_check_branch
          %329 = sbr.rel (%p327) target = $region48
        $region47: #{tpu_custom_call.1} parent=11 // pred_region
          _
        $region48: #{tpu_custom_call.1} parent=11 // pred_fallthru
          _
      $region12: #{tpu_custom_call.1} parent=5 // pred_fallthru
        _
      %p330 = scmp.lt.s32.totalorder %s20, 2
      // Predicated region
      $region49: #{tpu_custom_call.1} parent=5 // pred_check
        %p331 = pneg %p330
      $region50: #{tpu_custom_call.1} parent=5 // pred_check_branch
        %333 = sbr.rel (%p331) target = $region52
      $region51: #{tpu_custom_call.1} parent=5 // pred_region
        // Predicated region
        $region53: #{tpu_custom_call.1} parent=51 // pred_check
          %p334 = pneg %p54
        $region54: #{tpu_custom_call.1} parent=51 // pred_check_branch
          %336 = sbr.rel (%p334) target = $region56
        $region55: #{tpu_custom_call.1} parent=51 // pred_region
          %p337 = scmp.lt.s32.totalorder %s27, 1
          %s338 = scalar_select %p337, %s27, 1
          %p339 = scmp.lt.s32.totalorder %s28, 0
          %s340 = scalar_select %p339, %s28, 0
          %s341 = smul.addr %s340, 6
          %s342 = smul.addr %s338, 6
          %s343 = sadd.s32 %s341, %s342
          %s344 = smul.addr %s343, 4
          %s345 = scalar_lea.vmem %s0, %s344
        $region56: #{tpu_custom_call.1} parent=51 // pred_fallthru
          _
      $region52: #{tpu_custom_call.1} parent=5 // pred_fallthru
        _
      %p346 = scmp.le.s32.totalorder 1, %s20
      %p347 = scmp.lt.s32.totalorder %s20, 3
      %p348 = pnand %p346, %p347
      %p349 = pneg %p348
      // Predicated region
      $region57: #{tpu_custom_call.1} parent=5 // pred_check
        _
      $region58: #{tpu_custom_call.1} parent=5 // pred_check_branch
        %351 = sbr.rel (%p348) target = $region60
      $region59: #{tpu_custom_call.1} parent=5 // pred_region
        %s352 = ssub.s32 %s20, 1
        // Predicated region
        $region61: #{tpu_custom_call.1} parent=59 // pred_check
          %p353 = pneg %p186
        $region62: #{tpu_custom_call.1} parent=59 // pred_check_branch
          %355 = sbr.rel (%p353) target = $region64
        $region63: #{tpu_custom_call.1} parent=59 // pred_region
          %357 = dma.done [#allocation4], 256
        $region64: #{tpu_custom_call.1} parent=59 // pred_fallthru
          _
        %p358 = scmp.lt.s32.totalorder %s29, 1
        %s359 = scalar_select %p358, %s29, 1
        %p360 = scmp.lt.s32.totalorder %s30, 0
        %s361 = scalar_select %p360, %s30, 0
        %s362 = smul.addr %s361, 6
        %s363 = smul.addr %s359, 6
        %s364 = sadd.s32 %s362, %s363
        %s365 = smul.addr %s364, 4
        %s366 = scalar_lea.vmem %s0, %s365
        %p367 = pneg %p60
        %p368 = pneg %p57
        %p369 = pneg %p81
        %p370 = pneg %p78
        %p371 = pneg %p102
        %p372 = pneg %p99
        %p373 = pneg %p123
        %p374 = pneg %p120
        %p375 = pneg %p144
        %p376 = pneg %p141
        %p377 = pneg %p165
        %p378 = pneg %p162
        %p379 = pneg %p186
        %p380 = pneg %p183
        %p381 = pneg %p207
        %p382 = pneg %p204
        %p383 = pneg %p228
        %p384 = pneg %p225
        %p385 = pneg %p249
        %p386 = pneg %p246
        %p387 = pneg %p277
        %p388 = pneg %p274
        %s389 = sand.u32 %s264, 1
        %s390 = scalar_lea.sflag [#allocation5], %s389
        %s391 = sand.u32 %s264, 1
        %s392 = smul.addr %s391, 16
        %s393 = scalar_lea.vmem [#allocation6], %s392
        %p394 = scmp.lt.s32.totalorder %s29, 1
        %s395 = scalar_select %p394, %s29, 1
        %p396 = scmp.lt.s32.totalorder %s30, 0
        %s397 = scalar_select %p396, %s30, 0
        %s398 = smul.addr %s397, 6
        %s399 = smul.addr %s395, 6
        %s400 = sadd.s32 %s398, %s399
        %s401 = smul.addr %s400, 4
        %s402 = scalar_lea.vmem %s0, %s401
        %s403 = smul.u32 2, %s30
        %v405 = vld [vmem:[%s402] sm:$0xf]
        %v406 = vld [vmem:[%s402 + $0x4] sm:$0xf]
        %v407 = vld [vmem:[%s402 + $0x8] sm:$0xf]
        %v408 = vld [vmem:[%s402 + $0xc] sm:$0xf]
        %v409 = vld [vmem:[%s402 + $0x10] sm:$0xf]
        %v410 = vld [vmem:[%s402 + $0x14] sm:$0xf]
        %v411 = vld [vmem:[%s1] sm:$0xf]
        %v412 = vld [vmem:[%s1 + $0x4] sm:$0xf]
        %v413 = vld [vmem:[%s1 + $0x8] sm:$0xf]
        %v414 = vld [vmem:[%s1 + $0xc] sm:$0xf]
        %v415 = vld [vmem:[%s1 + $0x10] sm:$0xf]
        %v416 = vld [vmem:[%s1 + $0x14] sm:$0xf]
        %v417 = vld [vmem:[%s1 + $0x18] sm:$0xf]
        %v418 = vld [vmem:[%s1 + $0x1c] sm:$0xf]
        %v419 = vld [vmem:[%s1 + $0x20] sm:$0xf]
        %v420 = vld [vmem:[%s1 + $0x24] sm:$0xf]
        %v421 = vld [vmem:[%s1 + $0x28] sm:$0xf]
        %v422 = vld [vmem:[%s1 + $0x2c] sm:$0xf]
        %v423 = vld [vmem:[%s1 + $0x30] sm:$0xf]
        %v424 = vld [vmem:[%s1 + $0x34] sm:$0xf]
        %v425 = vld [vmem:[%s1 + $0x38] sm:$0xf]
        %v426 = vld [vmem:[%s1 + $0x3c] sm:$0xf]
        %v427 = vld [vmem:[%s2] sm:$0x1]
        %v429 = vperm.slane %v427, 0
        %v437 = vunpack.c.l.b16 %v405
        %v438 = vunpack.c.l.b16 %v406
        %v439 = vunpack.c.l.b16 %v407
        %v440 = vunpack.c.l.b16 %v408
        %v441 = vunpack.c.l.b16 %v409
        %v442 = vunpack.c.l.b16 %v410
        %v443 = vpack.c.b16 %v438, %v437
        %v444 = vpack.c.b16 %v440, %v439
        %v445 = vpack.c.b16 %v442, %v441
        %v465 = vunpack.c.l.b16 %v411
        %v466 = vunpack.c.l.b16 %v412
        %v467 = vunpack.c.l.b16 %v413
        %v468 = vunpack.c.l.b16 %v414
        %v469 = vunpack.c.l.b16 %v415
        %v470 = vunpack.c.l.b16 %v416
        %v471 = vunpack.c.l.b16 %v417
        %v472 = vunpack.c.l.b16 %v418
        %v473 = vunpack.c.l.b16 %v419
        %v474 = vunpack.c.l.b16 %v420
        %v475 = vunpack.c.l.b16 %v421
        %v476 = vunpack.c.l.b16 %v422
        %v477 = vunpack.c.l.b16 %v423
        %v478 = vunpack.c.l.b16 %v424
        %v479 = vunpack.c.l.b16 %v425
        %v480 = vunpack.c.l.b16 %v426
        %v481 = vpack.c.b16 %v466, %v465
        %v482 = vpack.c.b16 %v468, %v467
        %v483 = vpack.c.b16 %v470, %v469
        %v484 = vpack.c.b16 %v472, %v471
        %v485 = vpack.c.b16 %v474, %v473
        %v486 = vpack.c.b16 %v476, %v475
        %v487 = vpack.c.b16 %v478, %v477
        %v488 = vpack.c.b16 %v480, %v479
        %497 = vmatpush.bf16.msra.mxu0 %v488
        %498 = vmatpush.bf16.msra.mxu0 %v487
        %499 = vmatpush.bf16.msra.mxu0 %v486
        %500 = vmatpush.bf16.msra.mxu0 %v485
        %501 = vmatpush.bf16.msra.mxu0 %v484
        %502 = vmatpush.bf16.msra.mxu0 %v483
        %503 = vmatpush.bf16.msra.mxu0 %v482
        %504 = vmatpush.bf16.msra.mxu0 %v481
        %505 = vmatmul.bf16.gmra.mxu0 %v443
        %v506 = vpop.f32.mrf.mxu0
        %v507 = vadd.f32 %v429, %v506
        %v508 = vpop.f32.mrf.mxu0
        %v509 = vadd.f32 %v429, %v508
        %510 = vmatmul.bf16.gmra.mxu0 %v444
        %v511 = vpop.f32.mrf.mxu0
        %v512 = vadd.f32 %v429, %v511
        %v513 = vpop.f32.mrf.mxu0
        %v514 = vadd.f32 %v429, %v513
        %515 = vmatmul.bf16.gmra.mxu0 %v445
        %v516 = vpop.f32.mrf.mxu0
        %v517 = vadd.f32 %v429, %v516
        %v518 = vpop.f32.mrf.mxu0
        %v519 = vadd.f32 %v429, %v518
        %520 = vdwg.mxu0
        %v521 = vlaneseq
        %v522 = vshrl.u32 %v521, 7
        %v523 = vadd.s32 %v522, 8
        %v524 = vadd.s32 %v522, 16
        %v525 = vadd.s32 %v522, 24
        %v526 = vadd.s32 %v522, 32
        %v527 = vadd.s32 %v522, 40
        %s528 = smul.u32 %s30, 16
        %s529 = ssub.s32 %s528, 16
        %v530 = vstv %s529
        %v531 = vadd.s32 %v522, %v530
        %v532 = vadd.s32 %v523, %v530
        %v533 = vadd.s32 %v524, %v530
        %v534 = vadd.s32 %v525, %v530
        %v535 = vadd.s32 %v526, %v530
        %v536 = vadd.s32 %v527, %v530
        %vm537 = vcmp.ge.s32.totalorder %v531, 0
        %vm538 = vcmp.ge.s32.totalorder %v532, 0
        %vm539 = vcmp.ge.s32.totalorder %v533, 0
        %vm540 = vcmp.ge.s32.totalorder %v534, 0
        %vm541 = vcmp.ge.s32.totalorder %v535, 0
        %vm542 = vcmp.ge.s32.totalorder %v536, 0
        %vm543 = vcmp.lt.s32.totalorder %v531, 16
        %vm544 = vcmp.lt.s32.totalorder %v532, 16
        %vm545 = vcmp.lt.s32.totalorder %v533, 16
        %vm546 = vcmp.lt.s32.totalorder %v534, 16
        %vm547 = vcmp.lt.s32.totalorder %v535, 16
        %vm548 = vcmp.lt.s32.totalorder %v536, 16
        %vm549 = vmand %vm537, %vm543
        %vm550 = vmand %vm538, %vm544
        %vm551 = vmand %vm539, %vm545
        %vm552 = vmand %vm540, %vm546
        %vm553 = vmand %vm541, %vm547
        %vm554 = vmand %vm542, %vm548
        %v555 = vsel %vm549, 1, 0
        %v556 = vsel %vm550, 1, 0
        %v557 = vsel %vm551, 1, 0
        %v558 = vsel %vm552, 1, 0
        %v559 = vsel %vm553, 1, 0
        %v560 = vsel %vm554, 1, 0
        %v561 = vcvt.s32.f32 %v555
        %v562 = vcvt.s32.f32 %v556
        %v563 = vcvt.s32.f32 %v557
        %v564 = vcvt.s32.f32 %v558
        %v565 = vcvt.s32.f32 %v559
        %v566 = vcvt.s32.f32 %v560
        %v567 = vmul.f32 %v507, %v561
        %v568 = vmul.f32 %v509, %v562
        %v569 = vmul.f32 %v512, %v563
        %v570 = vmul.f32 %v514, %v564
        %v571 = vmul.f32 %v517, %v565
        %v572 = vmul.f32 %v519, %v566
        %vm573 = vcmask 261120
        %574 = vst.msk [vmem:[#allocation2] sm:$0xff] %vm573, 0.0
        %575 = vst.msk [vmem:[#allocation2 + $0x38] sm:$0xff] %vm573, 0.0
        %576 = vst.msk [vmem:[#allocation2 + $0x8] sm:$0xff] %vm573, %v567
        %577 = vst.msk [vmem:[#allocation2 + $0x10] sm:$0xff] %vm573, %v568
        %578 = vst.msk [vmem:[#allocation2 + $0x18] sm:$0xff] %vm573, %v569
        %579 = vst.msk [vmem:[#allocation2 + $0x20] sm:$0xff] %vm573, %v570
        %580 = vst.msk [vmem:[#allocation2 + $0x28] sm:$0xff] %vm573, %v571
        %581 = vst.msk [vmem:[#allocation2 + $0x30] sm:$0xff] %vm573, %v572
        loop: start=0, step=1, limit=3
        $region65: #{tpu_custom_call.1} parent=59 // loop_pre_header
          _
        $region66: #{tpu_custom_call.1} parent=59 // loop_header
          %s583 = sphi 0, %s587
          %p584 = scmp.ge.s32.totalorder %s583, 3
        $region67: #{tpu_custom_call.1} parent=59 // loop_header_branch
          %586 = sbr.rel (%p584) target = $region71
        $region68: #{tpu_custom_call.1} parent=59 // loop_body
          %s588 = smul.u32 %s583, 8
          %s589 = scalar_lea.vmem %s3, %s588
          %v590 = vld [vmem:[%s589] sm:$0x7f]
          %v591 = vld [vmem:[#allocation2 + $0x8] sm:$0xff]
          %v592 = vld [vmem:[#allocation2 + $0x10] sm:$0xff]
          %v593 = vld [vmem:[#allocation2 + $0x18] sm:$0xff]
          %v594 = vld [vmem:[#allocation2 + $0x20] sm:$0xff]
          %v595 = vld [vmem:[#allocation2 + $0x28] sm:$0xff]
          %v596 = vld [vmem:[#allocation2 + $0x30] sm:$0xff]
          %v597 = vld [vmem:[#allocation2 + $0x5] sm:$0xff]
          %v598 = vld [vmem:[#allocation2 + $0xd] sm:$0xff]
          %v599 = vld [vmem:[#allocation2 + $0x15] sm:$0xff]
          %v600 = vld [vmem:[#allocation2 + $0x1d] sm:$0xff]
          %v601 = vld [vmem:[#allocation2 + $0x25] sm:$0xff]
          %v602 = vld [vmem:[#allocation2 + $0x2d] sm:$0xff]
          %v603 = vperm.slane %v590, 0
          %v604 = vmul.f32 %v597, %v603
          %v605 = vmul.f32 %v598, %v603
          %v606 = vmul.f32 %v599, %v603
          %v607 = vmul.f32 %v600, %v603
          %v608 = vmul.f32 %v601, %v603
          %v609 = vmul.f32 %v602, %v603
          %v610 = vadd.f32 %v591, %v604
          %v611 = vadd.f32 %v592, %v605
          %v612 = vadd.f32 %v593, %v606
          %v613 = vadd.f32 %v594, %v607
          %v614 = vadd.f32 %v595, %v608
          %v615 = vadd.f32 %v596, %v609
          %v616 = vld [vmem:[#allocation2 + $0x6] sm:$0xff]
          %v617 = vld [vmem:[#allocation2 + $0xe] sm:$0xff]
          %v618 = vld [vmem:[#allocation2 + $0x16] sm:$0xff]
          %v619 = vld [vmem:[#allocation2 + $0x1e] sm:$0xff]
          %v620 = vld [vmem:[#allocation2 + $0x26] sm:$0xff]
          %v621 = vld [vmem:[#allocation2 + $0x2e] sm:$0xff]
          %v622 = vperm.slane %v590, 1
          %v623 = vmul.f32 %v616, %v622
          %v624 = vmul.f32 %v617, %v622
          %v625 = vmul.f32 %v618, %v622
          %v626 = vmul.f32 %v619, %v622
          %v627 = vmul.f32 %v620, %v622
          %v628 = vmul.f32 %v621, %v622
          %v629 = vadd.f32 %v610, %v623
          %v630 = vadd.f32 %v611, %v624
          %v631 = vadd.f32 %v612, %v625
          %v632 = vadd.f32 %v613, %v626
          %v633 = vadd.f32 %v614, %v627
          %v634 = vadd.f32 %v615, %v628
          %v635 = vld [vmem:[#allocation2 + $0x7] sm:$0xff]
          %v636 = vld [vmem:[#allocation2 + $0xf] sm:$0xff]
          %v637 = vld [vmem:[#allocation2 + $0x17] sm:$0xff]
          %v638 = vld [vmem:[#allocation2 + $0x1f] sm:$0xff]
          %v639 = vld [vmem:[#allocation2 + $0x27] sm:$0xff]
          %v640 = vld [vmem:[#allocation2 + $0x2f] sm:$0xff]
          %v641 = vperm.slane %v590, 2
          %v642 = vmul.f32 %v635, %v641
          %v643 = vmul.f32 %v636, %v641
          %v644 = vmul.f32 %v637, %v641
          %v645 = vmul.f32 %v638, %v641
          %v646 = vmul.f32 %v639, %v641
          %v647 = vmul.f32 %v640, %v641
          %v648 = vadd.f32 %v629, %v642
          %v649 = vadd.f32 %v630, %v643
          %v650 = vadd.f32 %v631, %v644
          %v651 = vadd.f32 %v632, %v645
          %v652 = vadd.f32 %v633, %v646
          %v653 = vadd.f32 %v634, %v647
          %v654 = vperm.slane %v590, 3
          %v655 = vmul.f32 %v591, %v654
          %v656 = vmul.f32 %v592, %v654
          %v657 = vmul.f32 %v593, %v654
          %v658 = vmul.f32 %v594, %v654
          %v659 = vmul.f32 %v595, %v654
          %v660 = vmul.f32 %v596, %v654
          %v661 = vadd.f32 %v648, %v655
          %v662 = vadd.f32 %v649, %v656
          %v663 = vadd.f32 %v650, %v657
          %v664 = vadd.f32 %v651, %v658
          %v665 = vadd.f32 %v652, %v659
          %v666 = vadd.f32 %v653, %v660
          %v667 = vld [vmem:[#allocation2 + $0x9] sm:$0xff]
          %v668 = vld [vmem:[#allocation2 + $0x11] sm:$0xff]
          %v669 = vld [vmem:[#allocation2 + $0x19] sm:$0xff]
          %v670 = vld [vmem:[#allocation2 + $0x21] sm:$0xff]
          %v671 = vld [vmem:[#allocation2 + $0x29] sm:$0xff]
          %v672 = vld [vmem:[#allocation2 + $0x31] sm:$0xff]
          %v673 = vperm.slane %v590, 4
          %v674 = vmul.f32 %v667, %v673
          %v675 = vmul.f32 %v668, %v673
          %v676 = vmul.f32 %v669, %v673
          %v677 = vmul.f32 %v670, %v673
          %v678 = vmul.f32 %v671, %v673
          %v679 = vmul.f32 %v672, %v673
          %v680 = vadd.f32 %v661, %v674
          %v681 = vadd.f32 %v662, %v675
          %v682 = vadd.f32 %v663, %v676
          %v683 = vadd.f32 %v664, %v677
          %v684 = vadd.f32 %v665, %v678
          %v685 = vadd.f32 %v666, %v679
          %v686 = vld [vmem:[#allocation2 + $0xa] sm:$0xff]
          %v687 = vld [vmem:[#allocation2 + $0x12] sm:$0xff]
          %v688 = vld [vmem:[#allocation2 + $0x1a] sm:$0xff]
          %v689 = vld [vmem:[#allocation2 + $0x22] sm:$0xff]
          %v690 = vld [vmem:[#allocation2 + $0x2a] sm:$0xff]
          %v691 = vld [vmem:[#allocation2 + $0x32] sm:$0xff]
          %v692 = vperm.slane %v590, 5
          %v693 = vmul.f32 %v686, %v692
          %v694 = vmul.f32 %v687, %v692
          %v695 = vmul.f32 %v688, %v692
          %v696 = vmul.f32 %v689, %v692
          %v697 = vmul.f32 %v690, %v692
          %v698 = vmul.f32 %v691, %v692
          %v699 = vadd.f32 %v680, %v693
          %v700 = vadd.f32 %v681, %v694
          %v701 = vadd.f32 %v682, %v695
          %v702 = vadd.f32 %v683, %v696
          %v703 = vadd.f32 %v684, %v697
          %v704 = vadd.f32 %v685, %v698
          %v705 = vld [vmem:[#allocation2 + $0xb] sm:$0xff]
          %v706 = vld [vmem:[#allocation2 + $0x13] sm:$0xff]
          %v707 = vld [vmem:[#allocation2 + $0x1b] sm:$0xff]
          %v708 = vld [vmem:[#allocation2 + $0x23] sm:$0xff]
          %v709 = vld [vmem:[#allocation2 + $0x2b] sm:$0xff]
          %v710 = vld [vmem:[#allocation2 + $0x33] sm:$0xff]
          %v711 = vperm.slane %v590, 6
          %v712 = vmul.f32 %v705, %v711
          %v713 = vmul.f32 %v706, %v711
          %v714 = vmul.f32 %v707, %v711
          %v715 = vmul.f32 %v708, %v711
          %v716 = vmul.f32 %v709, %v711
          %v717 = vmul.f32 %v710, %v711
          %v718 = vadd.f32 %v699, %v712
          %v719 = vadd.f32 %v700, %v713
          %v720 = vadd.f32 %v701, %v714
          %v721 = vadd.f32 %v702, %v715
          %v722 = vadd.f32 %v703, %v716
          %v723 = vadd.f32 %v704, %v717
          %v724 = vmul.f32 %v718, %v561
          %v725 = vmul.f32 %v719, %v562
          %v726 = vmul.f32 %v720, %v563
          %v727 = vmul.f32 %v721, %v564
          %v728 = vmul.f32 %v722, %v565
          %v729 = vmul.f32 %v723, %v566
          %730 = vst.msk [vmem:[#allocation2 + $0x8] sm:$0xff] %vm573, %v724
          %731 = vst.msk [vmem:[#allocation2 + $0x10] sm:$0xff] %vm573, %v725
          %732 = vst.msk [vmem:[#allocation2 + $0x18] sm:$0xff] %vm573, %v726
          %733 = vst.msk [vmem:[#allocation2 + $0x20] sm:$0xff] %vm573, %v727
          %734 = vst.msk [vmem:[#allocation2 + $0x28] sm:$0xff] %vm573, %v728
          %735 = vst.msk [vmem:[#allocation2 + $0x30] sm:$0xff] %vm573, %v729
        $region69: #{tpu_custom_call.1} parent=59 // loop_footer
          %s587 = sadd.s32 1, %s583
        $region70: #{tpu_custom_call.1} parent=59 // loop_footer_branch
          %582 = sbr.rel target = $region66
        $region71: #{tpu_custom_call.1} parent=59 // loop_exit
          _
        %v736 = vld [vmem:[#allocation2 + $0x18] sm:$0xff]
        %v737 = vld [vmem:[#allocation2 + $0x20] sm:$0xff]
        %v738 = vpack.c.bf16 %v737, %v736
        %v739 = vld [vmem:[%s4] sm:$0xf]
        %v740 = vld [vmem:[%s4 + $0x4] sm:$0xf]
        %v741 = vld [vmem:[%s4 + $0x8] sm:$0xf]
        %v742 = vld [vmem:[%s4 + $0xc] sm:$0xf]
        %v743 = vld [vmem:[%s5] sm:$0x1]
        %v745 = vperm.slane %v743, 0
        %v751 = vunpack.c.l.b16 %v739
        %v752 = vunpack.c.l.b16 %v740
        %v753 = vunpack.c.l.b16 %v741
        %v754 = vunpack.c.l.b16 %v742
        %v755 = vpack.c.b16 %v752, %v751
        %v756 = vpack.c.b16 %v754, %v753
        %v760 = vsel %vm573, %v738, 0
        %762 = vmatpush.bf16.msra.mxu0 0
        %763 = vmatpush.bf16.msra.mxu0 0
        %764 = vmatpush.bf16.msra.mxu0 0
        %765 = vmatpush.bf16.msra.mxu0 0
        %766 = vmatpush.bf16.msra.mxu0 0
        %767 = vmatpush.bf16.msra.mxu0 0
        %768 = vmatpush.bf16.msra.mxu0 %v756
        %769 = vmatpush.bf16.msra.mxu0 %v755
        %770 = vmatmul.bf16.gmra.mxu0 %v760
        %v771 = vpop.f32.mrf.mxu0
        %v772 = vadd.f32 %v745, %v771
        %v773 = vpop.f32.mrf.mxu0
        %v774 = vadd.f32 %v745, %v773
        %775 = vdwg.mxu0
        %v776 = vmax.f32 %v772, 0.0
        %v777 = vmax.f32 %v774, 0.0
        %v778 = vpack.c.bf16 %v777, %v776
        %v779 = vld [vmem:[#allocation3] sm:$0xf]
        %v780 = vld [vmem:[#allocation3 + $0x4] sm:$0xf]
        %v781 = vld [vmem:[#allocation3 + $0x8] sm:$0xf]
        %v782 = vld [vmem:[#allocation3 + $0xc] sm:$0xf]
        %v783 = vld [vmem:[%s7] sm:$0x1]
        %v785 = vperm.slane %v783, 0
        %v791 = vunpack.c.l.b16 %v779
        %v792 = vunpack.c.l.b16 %v780
        %v793 = vunpack.c.l.b16 %v781
        %v794 = vunpack.c.l.b16 %v782
        %v795 = vpack.c.b16 %v792, %v791
        %v796 = vpack.c.b16 %v794, %v793
        %v800 = vsel %vm573, %v778, 0
        %802 = vmatpush.bf16.msra.mxu0 0
        %803 = vmatpush.bf16.msra.mxu0 0
        %804 = vmatpush.bf16.msra.mxu0 0
        %805 = vmatpush.bf16.msra.mxu0 0
        %806 = vmatpush.bf16.msra.mxu0 0
        %807 = vmatpush.bf16.msra.mxu0 0
        %808 = vmatpush.bf16.msra.mxu0 %v796
        %809 = vmatpush.bf16.msra.mxu0 %v795
        %810 = vmatmul.bf16.gmra.mxu0 %v800
        %v811 = vpop.f32.mrf.mxu0
        %v812 = vadd.f32 %v785, %v811
        %v813 = vpop.f32.mrf.mxu0
        %v814 = vadd.f32 %v785, %v813
        %815 = vdwg.mxu0
        %v816 = vmax.f32 %v812, 0.0
        %v817 = vmax.f32 %v814, 0.0
        %v818 = vpack.c.bf16 %v817, %v816
        %v819 = vld [vmem:[%s8] sm:$0xf]
        %v820 = vld [vmem:[%s8 + $0x4] sm:$0xf]
        %v821 = vld [vmem:[%s8 + $0x8] sm:$0xf]
        %v822 = vld [vmem:[%s8 + $0xc] sm:$0xf]
        %v823 = vld [vmem:[%s9] sm:$0x1]
        %v825 = vperm.slane %v823, 0
        %v831 = vunpack.c.l.b16 %v819
        %v832 = vunpack.c.l.b16 %v820
        %v833 = vunpack.c.l.b16 %v821
        %v834 = vunpack.c.l.b16 %v822
        %v835 = vpack.c.b16 %v832, %v831
        %v836 = vpack.c.b16 %v834, %v833
        %v840 = vsel %vm573, %v818, 0
        %842 = vmatpush.bf16.msra.mxu0 0
        %843 = vmatpush.bf16.msra.mxu0 0
        %844 = vmatpush.bf16.msra.mxu0 0
        %845 = vmatpush.bf16.msra.mxu0 0
        %846 = vmatpush.bf16.msra.mxu0 0
        %847 = vmatpush.bf16.msra.mxu0 0
        %848 = vmatpush.bf16.msra.mxu0 %v836
        %849 = vmatpush.bf16.msra.mxu0 %v835
        %850 = vmatmul.bf16.gmra.mxu0 %v840
        %v851 = vpop.f32.mrf.mxu0
        %v852 = vadd.f32 %v825, %v851
        %v853 = vpop.f32.mrf.mxu0
        %v854 = vadd.f32 %v825, %v853
        %855 = vdwg.mxu0
        %vm856 = vcmask 130048
        %857 = vst.msk [vmem:[%s393] sm:$0xff] %vm856, %v852
        %858 = vst.msk [vmem:[%s393 + $0x8] sm:$0xff] %vm856, %v854
        %s859 = sand.u32 %s264, 1
        %s860 = scalar_lea.sflag [#allocation5], %s859
        %s861 = sand.u32 %s264, 1
        %s862 = smul.addr %s861, 16
        %s863 = scalar_lea.vmem [#allocation6], %s862
        // Predicated region
        $region72: #{tpu_custom_call.1} parent=59 // pred_check
          %p864 = pneg %p274
        $region73: #{tpu_custom_call.1} parent=59 // pred_check_branch
          %866 = sbr.rel (%p864) target = $region75
        $region74: #{tpu_custom_call.1} parent=59 // pred_region
          %s867 = smul.u32 2, %s30
          %869 = vsyncadd %s860, 0
          %s870 = smul.addr %s29, 2
          %s871 = sadd.s32 %s867, %s870
          %s872 = smul.addr %s871, 8
          %s873 = scalar_lea.hbm %s10, %s872
          %s874 = sshll.u32 %s863, 4
          %s875 = int_to_ptr.vmem [resolvable:$true] %s874
          %s876 = sshll.u32 %s873, 4
          %s877 = int_to_ptr.hbm [resolvable:$true] %s876
          %882 = dma.vmem_to_hbm [thread:$0]  %s875, 256, %s877, %s860, 128, 128, 8
        $region75: #{tpu_custom_call.1} parent=59 // pred_fallthru
          _
      $region60: #{tpu_custom_call.1} parent=5 // pred_fallthru
        _
      %p883 = scmp.le.s32.totalorder 2, %s20
      // Predicated region
      $region76: #{tpu_custom_call.1} parent=5 // pred_check
        %p884 = pneg %p883
      $region77: #{tpu_custom_call.1} parent=5 // pred_check_branch
        %886 = sbr.rel (%p884) target = $region79
      $region78: #{tpu_custom_call.1} parent=5 // pred_region
        %s887 = ssub.s32 %s20, 2
        // Predicated region
        $region80: #{tpu_custom_call.1} parent=78 // pred_check
          %p888 = pneg %p280
        $region81: #{tpu_custom_call.1} parent=78 // pred_check_branch
          %890 = sbr.rel (%p888) target = $region83
        $region82: #{tpu_custom_call.1} parent=78 // pred_region
          %s891 = sand.u32 %s265, 1
          %s892 = scalar_lea.sflag [#allocation5], %s891
          %s893 = sand.u32 %s265, 1
          %s894 = smul.addr %s893, 16
          %s895 = scalar_lea.vmem [#allocation6], %s894
          %897 = dma.done %s892, 256
        $region83: #{tpu_custom_call.1} parent=78 // pred_fallthru
          _
      $region79: #{tpu_custom_call.1} parent=5 // pred_fallthru
        _
    $region6: #{tpu_custom_call.1} parent=1 // loop_footer
      %s24 = sadd.s32 1, %s20
    $region7: #{tpu_custom_call.1} parent=1 // loop_footer_branch
      %19 = sbr.rel target = $region3
    $region8: #{tpu_custom_call.1} parent=1 // loop_exit
      _
    %898 = vsyncpa [#allocation4], 1
    %s899 = scalar_lea.sflag [#allocation4], 1
    %900 = vsyncpa %s899, 1
    %901 = vsyncpa [#allocation5], 1
    %s902 = scalar_lea.sflag [#allocation5], 1
    %903 = vsyncpa %s902, 1

</llo_original>
